<compile_context>
chip_gen: v5e
topology: v5e:2x2
jax: 0.10.0
libtpu: 0.0.40
codegen_flags: <defaults>
</compile_context>

<pallas_src>
import jax
import jax.numpy as jnp
from jax.experimental import pallas as pl
from jax.experimental.pallas import tpu as pltpu

EPS = 0.0        # GINEConv default eps (train_eps=False) -- Python float, never traced
NEG = -1e30      # max-pool sentinel -- only used host-side to build the additive mask


# ---------------------------------------------------------------------------
# Fused kernel: num_layers x (GINEConv + ReLU)  ->  max||mean pool -> MLP head
# ---------------------------------------------------------------------------
def _make_fused_gin_kernel(num_layers, num_graphs):
    def kernel(*refs):
        (x_ref, ea_ref, gsrc_ref, gdstT_ref, mask_ref, negmaskT_ref,
         invc_ref) = refs[:7]
        layer_refs = refs[7:7 + 4 * num_layers]
        w1a_ref, w1b_ref, b1_ref, w2_ref, b2_ref = refs[7 + 4 * num_layers:-1]
        o_ref = refs[-1]

        # Shared operands hoisted out of the (static) layer loop: loaded once.
        ea = ea_ref[...]                  # [E, De] f32
        gsrc = gsrc_ref[...]              # [E, N]  bf16 one_hot(src)   -> MXU as-is
        gdst_t = gdstT_ref[...]           # [N, E]  bf16 one_hot(dst).T -> MXU as-is
        mask = mask_ref[...]              # [B, N]  bf16 one_hot(batch)
        negmask_t = negmaskT_ref[...]     # [N, B]  f32 additive max-pool mask (0 / -1e30)

        h = x_ref[...]                    # [N, F] f32
        for l in range(num_layers):
            we_ref, be_ref, w_ref, b_ref = layer_refs[4 * l:4 * l + 4]
            # GINEConv edge projection: Linear(edge_dim -> d_in)
            ef = (jnp.dot(ea, we_ref[...], preferred_element_type=jnp.float32)
                  + be_ref[...])                                            # [E, F]
            # gather x[src]: bf16 one-hot @ bf16 activations, f32 accumulation
            x_src = jnp.dot(gsrc, h.astype(jnp.bfloat16),
                            preferred_element_type=jnp.float32)            # [E, F]
            msg = jnp.maximum(x_src + ef, 0.0)                              # ReLU(x_j + lin(e))
            # scatter-add to destination nodes (pre-transposed one-hot, plain dot)
            aggr = jnp.dot(gdst_t, msg.astype(jnp.bfloat16),
                           preferred_element_type=jnp.float32)              # [N, F]
            h = (1.0 + EPS) * h + aggr
            h = jnp.maximum(
                jnp.dot(h, w_ref[...], preferred_element_type=jnp.float32)
                + b_ref[...],
                0.0)                                                        # [N, H]

        # ---------------- pooling head ----------------
        h_b = h.astype(jnp.bfloat16)
        # mean pool: single [B,N] @ [N,H] matmul, normalized by per-graph count
        meanp = (jnp.dot(mask, h_b, preferred_element_type=jnp.float32)
                 * invc_ref[...])                                           # [B, H]
        # max pool: per-graph additive mask column + sublane reduce (no [B,N,H] temp)
        max_rows = []
        for b in range(num_graphs):
            mb = jnp.max(h + negmask_t[:, b:b + 1], axis=0, keepdims=True)  # [1, H]
            max_rows.append(mb)
        maxp = jnp.concatenate(max_rows, axis=0)                            # [B, H]

        # concat([max, mean], 1) @ W1 == max @ W1[:H] + mean @ W1[H:]
        h1 = jnp.maximum(
            jnp.dot(maxp, w1a_ref[...], preferred_element_type=jnp.float32)
            + jnp.dot(meanp, w1b_ref[...], preferred_element_type=jnp.float32)
            + b1_ref[...],
            0.0)
        # dropout(p=0.2) is identity in eval mode
        # TODO(synk): training-mode dropout (pltpu.prng_*) not implemented
        o_ref[...] = (jnp.dot(h1, w2_ref[...], preferred_element_type=jnp.float32)
                      + b2_ref[...])

    return kernel


def gin_model_forward(params, x, edge_index, edge_attr, batch, num_graphs):
    N = x.shape[0]
    src, dst = edge_index[0], edge_index[1]

    # glue: one-hot gather / scatter / pool matrices; 0/1 values are exact in
    # bf16, halving their HBM/VMEM footprint; scatter matrix built transposed.
    node_ids = jnp.arange(N, dtype=jnp.int32)
    gsrc = (src[:, None] == node_ids[None, :]).astype(jnp.bfloat16)          # [E, N]
    gdst_t = (node_ids[:, None] == dst[None, :]).astype(jnp.bfloat16)        # [N, E]
    graph_ids = jnp.arange(num_graphs, dtype=jnp.int32)
    mask = (graph_ids[:, None] == batch[None, :]).astype(jnp.bfloat16)       # [B, N]
    invc = 1.0 / jnp.sum(mask.astype(jnp.float32), axis=1, keepdims=True)    # [B, 1]
    # additive max-pool mask, pre-transposed to [N, B]: 0 in-graph, -1e30 otherwise
    negmask_t = (batch[:, None] != graph_ids[None, :]).astype(jnp.float32) * NEG

    layers = params["layers"]
    num_layers = len(layers)
    H = layers[-1][2].shape[1]
    W1, b1, W2, b2 = params["W1"], params["b1"], params["W2"], params["b2"]
    w1a, w1b = W1[:H], W1[H:]                     # split concat-weights (glue)

    flat_layer_params = []
    for (We, be, W, b) in layers:
        flat_layer_params += [We, be, W, b]

    B = num_graphs
    out_channels = W2.shape[1]
    operands = [x, edge_attr, gsrc, gdst_t, mask, negmask_t, invc,
                *flat_layer_params, w1a, w1b, b1, W2, b2]

    total_bytes = sum(int(a.size) * jnp.dtype(a.dtype).itemsize for a in operands)
    vmem_limit = int(min(48 * 2**20, max(16 * 2**20, 4 * total_bytes)))

    vmem = pl.BlockSpec(memory_space=pltpu.MemorySpace.VMEM)

    return pl.pallas_call(
        _make_fused_gin_kernel(num_layers, num_graphs),
        out_shape=jax.ShapeDtypeStruct((B, out_channels), jnp.float32),
        in_specs=[vmem] * len(operands),
        out_specs=vmem,
        compiler_params=pltpu.CompilerParams(vmem_limit_bytes=vmem_limit),
    )(*operands)


# ---------------------------------------------------------------------------
# Pure-JAX reference (for correctness check)
# ---------------------------------------------------------------------------
def ref_forward(params, x, edge_index, edge_attr, batch, num_graphs):
    hp = jax.lax.Precision.HIGHEST
    src, dst = edge_index[0], edge_index[1]
    h = x
    for (We, be, W, b) in params["layers"]:
        ef = jnp.dot(edge_attr, We, precision=hp) + be
        msg = jnp.maximum(h[src] + ef, 0.0)
        aggr = jax.ops.segment_sum(msg, dst, num_segments=h.shape[0])
        h = jnp.maximum(jnp.dot((1.0 + EPS) * h + aggr, W, precision=hp) + b, 0.0)
    maxp = jax.ops.segment_max(h, batch, num_segments=num_graphs)
    ones = jnp.ones((h.shape[0], 1), jnp.float32)
    meanp = (jax.ops.segment_sum(h, batch, num_segments=num_graphs)
             / jax.ops.segment_sum(ones, batch, num_segments=num_graphs))
    feat = jnp.concatenate([maxp, meanp], axis=1)
    h1 = jnp.maximum(jnp.dot(feat, params["W1"], precision=hp) + params["b1"], 0.0)
    return jnp.dot(h1, params["W2"], precision=hp) + params["b2"]


if __name__ == "__main__":
    in_channels, hidden, out_channels, edge_dim, num_layers = 4, 32, 3, 6, 2
    N, E, B = 8, 16, 2

    key = jax.random.PRNGKey(0)
    keys = jax.random.split(key, 16)

    x = jax.random.normal(keys[0], (N, in_channels), dtype=jnp.float32)
    edge_attr = jax.random.normal(keys[1], (E, edge_dim), dtype=jnp.float32)
    batch = jnp.array([0] * (N // 2) + [1] * (N // 2), dtype=jnp.int32)
    # edges stay within their own graph
    src0 = jax.random.randint(keys[2], (E // 2,), 0, N // 2)
    dst0 = jax.random.randint(keys[3], (E // 2,), 0, N // 2)
    src1 = jax.random.randint(keys[4], (E // 2,), N // 2, N)
    dst1 = jax.random.randint(keys[5], (E // 2,), N // 2, N)
    edge_index = jnp.stack([jnp.concatenate([src0, src1]),
                            jnp.concatenate([dst0, dst1])]).astype(jnp.int32)

    def lin_init(k, fan_in, fan_out):
        kw, kb = jax.random.split(k)
        w = jax.random.normal(kw, (fan_in, fan_out), jnp.float32) * (1.0 / jnp.sqrt(fan_in))
        b = jax.random.normal(kb, (1, fan_out), jnp.float32) * 0.1
        return w, b

    layers = []
    d_in = in_channels
    for l in range(num_layers):
        We, be = lin_init(keys[6 + 2 * l], edge_dim, d_in)   # GINEConv edge lin
        W, b = lin_init(keys[7 + 2 * l], d_in, hidden)       # GINEConv nn (Linear)
        layers.append((We, be, W, b))
        d_in = hidden
    W1, b1 = lin_init(keys[12], 2 * hidden, hidden // 2)
    W2, b2 = lin_init(keys[13], hidden // 2, out_channels)
    params = {"layers": layers, "W1": W1, "b1": b1, "W2": W2, "b2": b2}

    out = gin_model_forward(params, x, edge_index, edge_attr, batch, B)
    out = jax.block_until_ready(out)
    ref = ref_forward(params, x, edge_index, edge_attr, batch, B)

    assert out.shape == (B, out_channels)
    assert jnp.allclose(out, ref, rtol=2e-2, atol=2e-2), (out, ref)
    print("KERNEL_OK")
</pallas_src>

<mosaic_0001>
module attributes {stable_mosaic.version = 11 : i64} {
  func.func @kernel(%arg0: memref<8x4xf32, #tpu.memory_space<vmem>>, %arg1: memref<16x6xf32, #tpu.memory_space<vmem>>, %arg2: memref<16x8xbf16, #tpu.memory_space<vmem>>, %arg3: memref<8x16xbf16, #tpu.memory_space<vmem>>, %arg4: memref<2x8xbf16, #tpu.memory_space<vmem>>, %arg5: memref<8x2xf32, #tpu.memory_space<vmem>>, %arg6: memref<2x1xf32, #tpu.memory_space<vmem>>, %arg7: memref<6x4xf32, #tpu.memory_space<vmem>>, %arg8: memref<1x4xf32, #tpu.memory_space<vmem>>, %arg9: memref<4x32xf32, #tpu.memory_space<vmem>>, %arg10: memref<1x32xf32, #tpu.memory_space<vmem>>, %arg11: memref<6x32xf32, #tpu.memory_space<vmem>>, %arg12: memref<1x32xf32, #tpu.memory_space<vmem>>, %arg13: memref<32x32xf32, #tpu.memory_space<vmem>>, %arg14: memref<1x32xf32, #tpu.memory_space<vmem>>, %arg15: memref<32x16xf32, #tpu.memory_space<vmem>>, %arg16: memref<32x16xf32, #tpu.memory_space<vmem>>, %arg17: memref<1x16xf32, #tpu.memory_space<vmem>>, %arg18: memref<16x3xf32, #tpu.memory_space<vmem>>, %arg19: memref<1x3xf32, #tpu.memory_space<vmem>>, %arg20: memref<2x3xf32, #tpu.memory_space<vmem>>) attributes {dimension_semantics = [], scalar_prefetch = 0 : i64, scratch_operands = 0 : i64, tpu.core_type = #tpu.core_type<tc>} {
    %c0 = arith.constant 0 : index
    %c0_0 = arith.constant 0 : index
    %0 = vector.load %arg1[%c0, %c0_0] : memref<16x6xf32, #tpu.memory_space<vmem>>, vector<16x6xf32>
    %c0_1 = arith.constant 0 : index
    %c0_2 = arith.constant 0 : index
    %1 = vector.load %arg2[%c0_1, %c0_2] : memref<16x8xbf16, #tpu.memory_space<vmem>>, vector<16x8xbf16>
    %c0_3 = arith.constant 0 : index
    %c0_4 = arith.constant 0 : index
    %2 = vector.load %arg3[%c0_3, %c0_4] : memref<8x16xbf16, #tpu.memory_space<vmem>>, vector<8x16xbf16>
    %c0_5 = arith.constant 0 : index
    %c0_6 = arith.constant 0 : index
    %3 = vector.load %arg4[%c0_5, %c0_6] : memref<2x8xbf16, #tpu.memory_space<vmem>>, vector<2x8xbf16>
    %c0_7 = arith.constant 0 : index
    %c0_8 = arith.constant 0 : index
    %4 = vector.load %arg5[%c0_7, %c0_8] : memref<8x2xf32, #tpu.memory_space<vmem>>, vector<8x2xf32>
    %c0_9 = arith.constant 0 : index
    %c0_10 = arith.constant 0 : index
    %5 = vector.load %arg0[%c0_9, %c0_10] : memref<8x4xf32, #tpu.memory_space<vmem>>, vector<8x4xf32>
    %c0_11 = arith.constant 0 : index
    %c0_12 = arith.constant 0 : index
    %6 = vector.load %arg7[%c0_11, %c0_12] : memref<6x4xf32, #tpu.memory_space<vmem>>, vector<6x4xf32>
    %cst = arith.constant dense<0.000000e+00> : vector<16x4xf32>
    %7 = tpu.matmul %0, %6, %cst {dimension_numbers = #tpu.dot_dimension_numbers<[1], [0], [0], [1], [0, 0, 1, 1], [], []>} : vector<16x6xf32>, vector<6x4xf32>, vector<16x4xf32> -> vector<16x4xf32>
    %c0_13 = arith.constant 0 : index
    %c0_14 = arith.constant 0 : index
    %8 = vector.load %arg8[%c0_13, %c0_14] : memref<1x4xf32, #tpu.memory_space<vmem>>, vector<1x4xf32>
    %9 = vector.broadcast %8 : vector<1x4xf32> to vector<16x4xf32>
    %10 = arith.addf %7, %9 : vector<16x4xf32>
    %11 = arith.truncf %5 : vector<8x4xf32> to vector<8x4xbf16>
    %cst_15 = arith.constant dense<0.000000e+00> : vector<16x4xf32>
    %12 = tpu.matmul %1, %11, %cst_15 {dimension_numbers = #tpu.dot_dimension_numbers<[1], [0], [0], [1], [0, 0, 1, 1], [], []>} : vector<16x8xbf16>, vector<8x4xbf16>, vector<16x4xf32> -> vector<16x4xf32>
    %13 = arith.addf %12, %10 : vector<16x4xf32>
    %cst_16 = arith.constant 0.000000e+00 : f32
    %14 = vector.broadcast %cst_16 : f32 to vector<16x4xf32>
    %15 = arith.maximumf %13, %14 : vector<16x4xf32>
    %16 = arith.truncf %15 : vector<16x4xf32> to vector<16x4xbf16>
    %cst_17 = arith.constant dense<0.000000e+00> : vector<8x4xf32>
    %17 = tpu.matmul %2, %16, %cst_17 {dimension_numbers = #tpu.dot_dimension_numbers<[1], [0], [0], [1], [0, 0, 1, 1], [], []>} : vector<8x16xbf16>, vector<16x4xbf16>, vector<8x4xf32> -> vector<8x4xf32>
    %cst_18 = arith.constant 1.000000e+00 : f32
    %18 = vector.broadcast %cst_18 : f32 to vector<8x4xf32>
    %19 = arith.mulf %18, %5 : vector<8x4xf32>
    %20 = arith.addf %19, %17 : vector<8x4xf32>
    %c0_19 = arith.constant 0 : index
    %c0_20 = arith.constant 0 : index
    %21 = vector.load %arg9[%c0_19, %c0_20] : memref<4x32xf32, #tpu.memory_space<vmem>>, vector<4x32xf32>
    %cst_21 = arith.constant dense<0.000000e+00> : vector<8x32xf32>
    %22 = tpu.matmul %20, %21, %cst_21 {dimension_numbers = #tpu.dot_dimension_numbers<[1], [0], [0], [1], [0, 0, 1, 1], [], []>} : vector<8x4xf32>, vector<4x32xf32>, vector<8x32xf32> -> vector<8x32xf32>
    %c0_22 = arith.constant 0 : index
    %c0_23 = arith.constant 0 : index
    %23 = vector.load %arg10[%c0_22, %c0_23] : memref<1x32xf32, #tpu.memory_space<vmem>>, vector<1x32xf32>
    %24 = vector.broadcast %23 : vector<1x32xf32> to vector<8x32xf32>
    %25 = arith.addf %22, %24 : vector<8x32xf32>
    %cst_24 = arith.constant 0.000000e+00 : f32
    %26 = vector.broadcast %cst_24 : f32 to vector<8x32xf32>
    %27 = arith.maximumf %25, %26 : vector<8x32xf32>
    %c0_25 = arith.constant 0 : index
    %c0_26 = arith.constant 0 : index
    %28 = vector.load %arg11[%c0_25, %c0_26] : memref<6x32xf32, #tpu.memory_space<vmem>>, vector<6x32xf32>
    %cst_27 = arith.constant dense<0.000000e+00> : vector<16x32xf32>
    %29 = tpu.matmul %0, %28, %cst_27 {dimension_numbers = #tpu.dot_dimension_numbers<[1], [0], [0], [1], [0, 0, 1, 1], [], []>} : vector<16x6xf32>, vector<6x32xf32>, vector<16x32xf32> -> vector<16x32xf32>
    %c0_28 = arith.constant 0 : index
    %c0_29 = arith.constant 0 : index
    %30 = vector.load %arg12[%c0_28, %c0_29] : memref<1x32xf32, #tpu.memory_space<vmem>>, vector<1x32xf32>
    %31 = vector.broadcast %30 : vector<1x32xf32> to vector<16x32xf32>
    %32 = arith.addf %29, %31 : vector<16x32xf32>
    %33 = arith.truncf %27 : vector<8x32xf32> to vector<8x32xbf16>
    %cst_30 = arith.constant dense<0.000000e+00> : vector<16x32xf32>
    %34 = tpu.matmul %1, %33, %cst_30 {dimension_numbers = #tpu.dot_dimension_numbers<[1], [0], [0], [1], [0, 0, 1, 1], [], []>} : vector<16x8xbf16>, vector<8x32xbf16>, vector<16x32xf32> -> vector<16x32xf32>
    %35 = arith.addf %34, %32 : vector<16x32xf32>
    %cst_31 = arith.constant 0.000000e+00 : f32
    %36 = vector.broadcast %cst_31 : f32 to vector<16x32xf32>
    %37 = arith.maximumf %35, %36 : vector<16x32xf32>
    %38 = arith.truncf %37 : vector<16x32xf32> to vector<16x32xbf16>
    %cst_32 = arith.constant dense<0.000000e+00> : vector<8x32xf32>
    %39 = tpu.matmul %2, %38, %cst_32 {dimension_numbers = #tpu.dot_dimension_numbers<[1], [0], [0], [1], [0, 0, 1, 1], [], []>} : vector<8x16xbf16>, vector<16x32xbf16>, vector<8x32xf32> -> vector<8x32xf32>
    %cst_33 = arith.constant 1.000000e+00 : f32
    %40 = vector.broadcast %cst_33 : f32 to vector<8x32xf32>
    %41 = arith.mulf %40, %27 : vector<8x32xf32>
    %42 = arith.addf %41, %39 : vector<8x32xf32>
    %c0_34 = arith.constant 0 : index
    %c0_35 = arith.constant 0 : index
    %43 = vector.load %arg13[%c0_34, %c0_35] : memref<32x32xf32, #tpu.memory_space<vmem>>, vector<32x32xf32>
    %cst_36 = arith.constant dense<0.000000e+00> : vector<8x32xf32>
    %44 = tpu.matmul %42, %43, %cst_36 {dimension_numbers = #tpu.dot_dimension_numbers<[1], [0], [0], [1], [0, 0, 1, 1], [], []>} : vector<8x32xf32>, vector<32x32xf32>, vector<8x32xf32> -> vector<8x32xf32>
    %c0_37 = arith.constant 0 : index
    %c0_38 = arith.constant 0 : index
    %45 = vector.load %arg14[%c0_37, %c0_38] : memref<1x32xf32, #tpu.memory_space<vmem>>, vector<1x32xf32>
    %46 = vector.broadcast %45 : vector<1x32xf32> to vector<8x32xf32>
    %47 = arith.addf %44, %46 : vector<8x32xf32>
    %cst_39 = arith.constant 0.000000e+00 : f32
    %48 = vector.broadcast %cst_39 : f32 to vector<8x32xf32>
    %49 = arith.maximumf %47, %48 : vector<8x32xf32>
    %50 = arith.truncf %49 : vector<8x32xf32> to vector<8x32xbf16>
    %cst_40 = arith.constant dense<0.000000e+00> : vector<2x32xf32>
    %51 = tpu.matmul %3, %50, %cst_40 {dimension_numbers = #tpu.dot_dimension_numbers<[1], [0], [0], [1], [0, 0, 1, 1], [], []>} : vector<2x8xbf16>, vector<8x32xbf16>, vector<2x32xf32> -> vector<2x32xf32>
    %c0_41 = arith.constant 0 : index
    %c0_42 = arith.constant 0 : index
    %52 = vector.load %arg6[%c0_41, %c0_42] : memref<2x1xf32, #tpu.memory_space<vmem>>, vector<2x1xf32>
    %53 = vector.broadcast %52 : vector<2x1xf32> to vector<2x32xf32>
    %54 = arith.mulf %51, %53 : vector<2x32xf32>
    %55 = vector.extract_strided_slice %4 {offsets = [0, 0], sizes = [8, 1], strides = [1, 1]} : vector<8x2xf32> to vector<8x1xf32>
    %56 = vector.broadcast %55 : vector<8x1xf32> to vector<8x32xf32>
    %57 = arith.addf %49, %56 : vector<8x32xf32>
    %cst_43 = arith.constant dense<0xFF800000> : vector<32xf32>
    %58 = vector.multi_reduction <maximumf>, %57, %cst_43 [0] : vector<8x32xf32> to vector<32xf32>
    %59 = vector.shape_cast %58 : vector<32xf32> to vector<1x32xf32>
    %60 = vector.extract_strided_slice %4 {offsets = [0, 1], sizes = [8, 1], strides = [1, 1]} : vector<8x2xf32> to vector<8x1xf32>
    %61 = vector.broadcast %60 : vector<8x1xf32> to vector<8x32xf32>
    %62 = arith.addf %49, %61 : vector<8x32xf32>
    %cst_44 = arith.constant dense<0xFF800000> : vector<32xf32>
    %63 = vector.multi_reduction <maximumf>, %62, %cst_44 [0] : vector<8x32xf32> to vector<32xf32>
    %64 = vector.shape_cast %63 : vector<32xf32> to vector<1x32xf32>
    %65 = tpu.concatenate %59, %64 in 0 : vector<1x32xf32>, vector<1x32xf32> -> vector<2x32xf32>
    %c0_45 = arith.constant 0 : index
    %c0_46 = arith.constant 0 : index
    %66 = vector.load %arg15[%c0_45, %c0_46] : memref<32x16xf32, #tpu.memory_space<vmem>>, vector<32x16xf32>
    %cst_47 = arith.constant dense<0.000000e+00> : vector<2x16xf32>
    %67 = tpu.matmul %65, %66, %cst_47 {dimension_numbers = #tpu.dot_dimension_numbers<[1], [0], [0], [1], [0, 0, 1, 1], [], []>} : vector<2x32xf32>, vector<32x16xf32>, vector<2x16xf32> -> vector<2x16xf32>
    %c0_48 = arith.constant 0 : index
    %c0_49 = arith.constant 0 : index
    %68 = vector.load %arg16[%c0_48, %c0_49] : memref<32x16xf32, #tpu.memory_space<vmem>>, vector<32x16xf32>
    %cst_50 = arith.constant dense<0.000000e+00> : vector<2x16xf32>
    %69 = tpu.matmul %54, %68, %cst_50 {dimension_numbers = #tpu.dot_dimension_numbers<[1], [0], [0], [1], [0, 0, 1, 1], [], []>} : vector<2x32xf32>, vector<32x16xf32>, vector<2x16xf32> -> vector<2x16xf32>
    %70 = arith.addf %67, %69 : vector<2x16xf32>
    %c0_51 = arith.constant 0 : index
    %c0_52 = arith.constant 0 : index
    %71 = vector.load %arg17[%c0_51, %c0_52] : memref<1x16xf32, #tpu.memory_space<vmem>>, vector<1x16xf32>
    %72 = vector.broadcast %71 : vector<1x16xf32> to vector<2x16xf32>
    %73 = arith.addf %70, %72 : vector<2x16xf32>
    %cst_53 = arith.constant 0.000000e+00 : f32
    %74 = vector.broadcast %cst_53 : f32 to vector<2x16xf32>
    %75 = arith.maximumf %73, %74 : vector<2x16xf32>
    %c0_54 = arith.constant 0 : index
    %c0_55 = arith.constant 0 : index
    %76 = vector.load %arg18[%c0_54, %c0_55] : memref<16x3xf32, #tpu.memory_space<vmem>>, vector<16x3xf32>
    %cst_56 = arith.constant dense<0.000000e+00> : vector<2x3xf32>
    %77 = tpu.matmul %75, %76, %cst_56 {dimension_numbers = #tpu.dot_dimension_numbers<[1], [0], [0], [1], [0, 0, 1, 1], [], []>} : vector<2x16xf32>, vector<16x3xf32>, vector<2x3xf32> -> vector<2x3xf32>
    %c0_57 = arith.constant 0 : index
    %c0_58 = arith.constant 0 : index
    %78 = vector.load %arg19[%c0_57, %c0_58] : memref<1x3xf32, #tpu.memory_space<vmem>>, vector<1x3xf32>
    %79 = vector.broadcast %78 : vector<1x3xf32> to vector<2x3xf32>
    %80 = arith.addf %77, %79 : vector<2x3xf32>
    %c0_59 = arith.constant 0 : index
    %c0_60 = arith.constant 0 : index
    %81 = vector.load %arg20[%c0_59, %c0_60] : memref<2x3xf32, #tpu.memory_space<vmem>>, vector<2x3xf32>
    tpu.vector_store %arg20[%c0_59, %c0_60], %80 {strides = array<i32>} : memref<2x3xf32, #tpu.memory_space<vmem>>, vector<2x3xf32>,
    return
  }
}

</mosaic_0001>

<llo_original>
// kernel: tpu_custom_call.1
$region0: #{tpu_custom_call.1}
  #allocation0 [shape = 'u32[]', space=smem, size = 0x4, offset = 0x4, fixed_abs, tag = 'smem constant byte address 0x4 - core index']
  #allocation1 [shape = 'u32[72,128]{1,0:T(1,128)}', space=vmem, size = 0x9000, scoped, tag = 'internal scratch']
  %s0 = inlined_call_operand.vmem [shape: f32[8,4], index: 0, kind: input, shape index: {}]
  %s1 = inlined_call_operand.vmem [shape: f32[16,6], index: 1, kind: input, shape index: {}]
  %s2 = inlined_call_operand.vmem [shape: bf16[16,8], index: 2, kind: input, shape index: {}]
  %s3 = inlined_call_operand.vmem [shape: bf16[8,16], index: 3, kind: input, shape index: {}]
  %s4 = inlined_call_operand.vmem [shape: bf16[2,8], index: 4, kind: input, shape index: {}]
  %s5 = inlined_call_operand.vmem [shape: f32[8,2], index: 5, kind: input, shape index: {}]
  %s6 = inlined_call_operand.vmem [shape: f32[2,1], index: 6, kind: input, shape index: {}]
  %s7 = inlined_call_operand.vmem [shape: f32[6,4], index: 7, kind: input, shape index: {}]
  %s8 = inlined_call_operand.vmem [shape: f32[1,4], index: 8, kind: input, shape index: {}]
  %s9 = inlined_call_operand.vmem [shape: f32[4,32], index: 9, kind: input, shape index: {}]
  %s10 = inlined_call_operand.vmem [shape: f32[1,32], index: 10, kind: input, shape index: {}]
  %s11 = inlined_call_operand.vmem [shape: f32[6,32], index: 11, kind: input, shape index: {}]
  %s12 = inlined_call_operand.vmem [shape: f32[1,32], index: 12, kind: input, shape index: {}]
  %s13 = inlined_call_operand.vmem [shape: f32[32,32], index: 13, kind: input, shape index: {}]
  %s14 = inlined_call_operand.vmem [shape: f32[1,32], index: 14, kind: input, shape index: {}]
  %s15 = inlined_call_operand.vmem [shape: f32[32,16], index: 15, kind: input, shape index: {}]
  %s16 = inlined_call_operand.vmem [shape: f32[32,16], index: 16, kind: input, shape index: {}]
  %s17 = inlined_call_operand.vmem [shape: f32[1,16], index: 17, kind: input, shape index: {}]
  %s18 = inlined_call_operand.vmem [shape: f32[16,3], index: 18, kind: input, shape index: {}]
  %s19 = inlined_call_operand.vmem [shape: f32[1,3], index: 19, kind: input, shape index: {}]
  %s20 = inlined_call_operand.hbm [shape: f32[2,3], index: 20, kind: output, shape index: {}]
  %s21 = sld [smem:[#allocation0]]
  $region90: #{tpu_custom_call.1} parent=0
    _
  %s23 = ssub.s32 1, %s21
  %s24 = scalar_select 0, %s23, %s21
  $region1: #{tpu_custom_call.1} parent=0
    #allocation2 [shape = 'u8[1024]{0}', space=vmem, size = 0x400, scoped, tag = 'output window, operand 0, single buffered']
    #allocation3 [shape = 's32[1]{0}', space=sflag, size = 0x4, scoped, tag = 'scoped memory for tpu_custom_call.1']
    %25 = vsyncpa [#allocation3], 0
    // Predicated region
    $region2: #{tpu_custom_call.1} parent=1 // pred_check
      _
    $region3: #{tpu_custom_call.1} parent=1 // pred_check_branch
      %27 = sbr.rel (0) target = $region5
    $region4: #{tpu_custom_call.1} parent=1 // pred_region
      _
    $region5: #{tpu_custom_call.1} parent=1 // pred_fallthru
      _
    // Predicated region
    $region6: #{tpu_custom_call.1} parent=1 // pred_check
      _
    $region7: #{tpu_custom_call.1} parent=1 // pred_check_branch
      %29 = sbr.rel (0) target = $region9
    $region8: #{tpu_custom_call.1} parent=1 // pred_region
      _
    $region9: #{tpu_custom_call.1} parent=1 // pred_fallthru
      _
    // Predicated region
    $region10: #{tpu_custom_call.1} parent=1 // pred_check
      _
    $region11: #{tpu_custom_call.1} parent=1 // pred_check_branch
      %31 = sbr.rel (0) target = $region13
    $region12: #{tpu_custom_call.1} parent=1 // pred_region
      _
    $region13: #{tpu_custom_call.1} parent=1 // pred_fallthru
      _
    // Predicated region
    $region14: #{tpu_custom_call.1} parent=1 // pred_check
      _
    $region15: #{tpu_custom_call.1} parent=1 // pred_check_branch
      %33 = sbr.rel (0) target = $region17
    $region16: #{tpu_custom_call.1} parent=1 // pred_region
      _
    $region17: #{tpu_custom_call.1} parent=1 // pred_fallthru
      _
    // Predicated region
    $region18: #{tpu_custom_call.1} parent=1 // pred_check
      _
    $region19: #{tpu_custom_call.1} parent=1 // pred_check_branch
      %35 = sbr.rel (0) target = $region21
    $region20: #{tpu_custom_call.1} parent=1 // pred_region
      _
    $region21: #{tpu_custom_call.1} parent=1 // pred_fallthru
      _
    // Predicated region
    $region22: #{tpu_custom_call.1} parent=1 // pred_check
      _
    $region23: #{tpu_custom_call.1} parent=1 // pred_check_branch
      %37 = sbr.rel (0) target = $region25
    $region24: #{tpu_custom_call.1} parent=1 // pred_region
      _
    $region25: #{tpu_custom_call.1} parent=1 // pred_fallthru
      _
    // Predicated region
    $region26: #{tpu_custom_call.1} parent=1 // pred_check
      _
    $region27: #{tpu_custom_call.1} parent=1 // pred_check_branch
      %39 = sbr.rel (0) target = $region29
    $region28: #{tpu_custom_call.1} parent=1 // pred_region
      _
    $region29: #{tpu_custom_call.1} parent=1 // pred_fallthru
      _
    // Predicated region
    $region30: #{tpu_custom_call.1} parent=1 // pred_check
      _
    $region31: #{tpu_custom_call.1} parent=1 // pred_check_branch
      %41 = sbr.rel (0) target = $region33
    $region32: #{tpu_custom_call.1} parent=1 // pred_region
      _
    $region33: #{tpu_custom_call.1} parent=1 // pred_fallthru
      _
    // Predicated region
    $region34: #{tpu_custom_call.1} parent=1 // pred_check
      _
    $region35: #{tpu_custom_call.1} parent=1 // pred_check_branch
      %43 = sbr.rel (0) target = $region37
    $region36: #{tpu_custom_call.1} parent=1 // pred_region
      _
    $region37: #{tpu_custom_call.1} parent=1 // pred_fallthru
      _
    // Predicated region
    $region38: #{tpu_custom_call.1} parent=1 // pred_check
      _
    $region39: #{tpu_custom_call.1} parent=1 // pred_check_branch
      %45 = sbr.rel (0) target = $region41
    $region40: #{tpu_custom_call.1} parent=1 // pred_region
      _
    $region41: #{tpu_custom_call.1} parent=1 // pred_fallthru
      _
    // Predicated region
    $region42: #{tpu_custom_call.1} parent=1 // pred_check
      _
    $region43: #{tpu_custom_call.1} parent=1 // pred_check_branch
      %47 = sbr.rel (0) target = $region45
    $region44: #{tpu_custom_call.1} parent=1 // pred_region
      _
    $region45: #{tpu_custom_call.1} parent=1 // pred_fallthru
      _
    // Predicated region
    $region46: #{tpu_custom_call.1} parent=1 // pred_check
      _
    $region47: #{tpu_custom_call.1} parent=1 // pred_check_branch
      %49 = sbr.rel (0) target = $region49
    $region48: #{tpu_custom_call.1} parent=1 // pred_region
      _
    $region49: #{tpu_custom_call.1} parent=1 // pred_fallthru
      _
    // Predicated region
    $region50: #{tpu_custom_call.1} parent=1 // pred_check
      _
    $region51: #{tpu_custom_call.1} parent=1 // pred_check_branch
      %51 = sbr.rel (0) target = $region53
    $region52: #{tpu_custom_call.1} parent=1 // pred_region
      _
    $region53: #{tpu_custom_call.1} parent=1 // pred_fallthru
      _
    // Predicated region
    $region54: #{tpu_custom_call.1} parent=1 // pred_check
      _
    $region55: #{tpu_custom_call.1} parent=1 // pred_check_branch
      %53 = sbr.rel (0) target = $region57
    $region56: #{tpu_custom_call.1} parent=1 // pred_region
      _
    $region57: #{tpu_custom_call.1} parent=1 // pred_fallthru
      _
    // Predicated region
    $region58: #{tpu_custom_call.1} parent=1 // pred_check
      _
    $region59: #{tpu_custom_call.1} parent=1 // pred_check_branch
      %55 = sbr.rel (0) target = $region61
    $region60: #{tpu_custom_call.1} parent=1 // pred_region
      _
    $region61: #{tpu_custom_call.1} parent=1 // pred_fallthru
      _
    // Predicated region
    $region62: #{tpu_custom_call.1} parent=1 // pred_check
      _
    $region63: #{tpu_custom_call.1} parent=1 // pred_check_branch
      %57 = sbr.rel (0) target = $region65
    $region64: #{tpu_custom_call.1} parent=1 // pred_region
      _
    $region65: #{tpu_custom_call.1} parent=1 // pred_fallthru
      _
    // Predicated region
    $region66: #{tpu_custom_call.1} parent=1 // pred_check
      _
    $region67: #{tpu_custom_call.1} parent=1 // pred_check_branch
      %59 = sbr.rel (0) target = $region69
    $region68: #{tpu_custom_call.1} parent=1 // pred_region
      _
    $region69: #{tpu_custom_call.1} parent=1 // pred_fallthru
      _
    // Predicated region
    $region70: #{tpu_custom_call.1} parent=1 // pred_check
      _
    $region71: #{tpu_custom_call.1} parent=1 // pred_check_branch
      %61 = sbr.rel (0) target = $region73
    $region72: #{tpu_custom_call.1} parent=1 // pred_region
      _
    $region73: #{tpu_custom_call.1} parent=1 // pred_fallthru
      _
    // Predicated region
    $region74: #{tpu_custom_call.1} parent=1 // pred_check
      _
    $region75: #{tpu_custom_call.1} parent=1 // pred_check_branch
      %63 = sbr.rel (0) target = $region77
    $region76: #{tpu_custom_call.1} parent=1 // pred_region
      _
    $region77: #{tpu_custom_call.1} parent=1 // pred_fallthru
      _
    // Predicated region
    $region78: #{tpu_custom_call.1} parent=1 // pred_check
      _
    $region79: #{tpu_custom_call.1} parent=1 // pred_check_branch
      %65 = sbr.rel (0) target = $region81
    $region80: #{tpu_custom_call.1} parent=1 // pred_region
      _
    $region81: #{tpu_custom_call.1} parent=1 // pred_fallthru
      _
    %v67 = vld [vmem:[%s1] sm:$0xff]
    %v68 = vld [vmem:[%s1 + $0x8] sm:$0xff]
    %v69 = vld [vmem:[%s2] sm:$0xf]
    %v70 = vld [vmem:[%s2 + $0x4] sm:$0xf]
    %v71 = vld [vmem:[%s3] sm:$0xf]
    %v72 = vld [vmem:[%s4] sm:$0x1]
    %v73 = vld [vmem:[%s5] sm:$0xff]
    %v74 = vld [vmem:[%s0] sm:$0xff]
    %v75 = vld [vmem:[%s7] sm:$0x3f]
    %v76 = vld [vmem:[%s8] sm:$0x1]
    %v78 = vperm.slane %v76, 0
    %vm80 = vcmask 48128
    %v82 = vsel %vm80, %v67, 0
    %v85 = vsel %vm80, %v68, 0
    %vm87 = vcmask 1045504
    %v89 = vsel %vm87, %v75, 0
    %91 = vmatpush.msra.mxu0 0.0
    %92 = vmatpush.msra.mxu0 0.0
    %93 = vmatpush.msra.mxu0 0.0
    %94 = vmatpush.msra.mxu0 0.0
    %95 = vmatpush.msra.mxu0 0.0
    %96 = vmatpush.msra.mxu0 0.0
    %97 = vmatpush.msra.mxu0 0.0
    %98 = vmatpush.msra.mxu0 0.0
    %99 = vmatpush.msra.mxu0 0.0
    %100 = vmatpush.msra.mxu0 0.0
    %101 = vmatpush.msra.mxu0 0.0
    %102 = vmatpush.msra.mxu0 0.0
    %103 = vmatpush.msra.mxu0 0.0
    %104 = vmatpush.msra.mxu0 0.0
    %105 = vmatpush.msra.mxu0 0.0
    %106 = vmatpush.msra.mxu0 %v89
    %107 = vmatmul.f32.gmra.mxu0 %v82
    %v108 = vpop.f32.mrf.mxu0
    %v109 = vadd.f32 %v78, %v108
    %110 = vmatmul.f32.gmra.mxu0 %v85
    %v111 = vpop.f32.mrf.mxu0
    %v112 = vadd.f32 %v78, %v111
    %113 = vdwg.mxu0
    %v114 = vpack.c.bf16 %v74, %v74
    %v117 = vunpack.c.l.b16 %v69
    %v118 = vunpack.c.l.b16 %v70
    %v119 = vpack.c.b16 %v118, %v117
    %vm120 = vcmask 64512
    %v122 = vsel %vm120, %v119, 0
    %vm124 = vcmask 1043456
    %v126 = vsel %vm124, %v114, 0
    %128 = vmatpush.bf16.msra.mxu0 0
    %129 = vmatpush.bf16.msra.mxu0 0
    %130 = vmatpush.bf16.msra.mxu0 0
    %131 = vmatpush.bf16.msra.mxu0 0
    %132 = vmatpush.bf16.msra.mxu0 0
    %133 = vmatpush.bf16.msra.mxu0 0
    %134 = vmatpush.bf16.msra.mxu0 0
    %135 = vmatpush.bf16.msra.mxu0 %v126
    %136 = vmatmul.bf16.gmra.mxu0 %v122
    %v137 = vpop.f32.mrf.mxu0
    %v138 = vadd.f32 %v109, %v137
    %v139 = vpop.f32.mrf.mxu0
    %v140 = vadd.f32 %v112, %v139
    %141 = vdwg.mxu0
    %v142 = vmax.f32 %v138, 0.0
    %v143 = vmax.f32 %v140, 0.0
    %v144 = vpack.c.bf16 %v143, %v142
    %vm145 = vcmask 130048
    %v147 = vsel %vm145, %v71, 0
    %149 = vmatpush.bf16.msra.mxu0 0
    %150 = vmatpush.bf16.msra.mxu0 0
    %151 = vmatpush.bf16.msra.mxu0 0
    %152 = vmatpush.bf16.msra.mxu0 0
    %153 = vmatpush.bf16.msra.mxu0 0
    %154 = vmatpush.bf16.msra.mxu0 0
    %155 = vmatpush.bf16.msra.mxu0 0
    %156 = vmatpush.bf16.msra.mxu0 %v144
    %157 = vmatmul.bf16.gmra.mxu0 %v147
    %v158 = vpop.f32.mrf.mxu0
    %v159 = vadd.f32 0.0, %v158
    %v160 = vpop.f32.mrf.mxu0
    %161 = vdwg.mxu0
    %v162 = vadd.f32 %v74, %v159
    %v163 = vld [vmem:[%s9] sm:$0xf]
    %v164 = vld [vmem:[%s10] sm:$0x1]
    %v166 = vperm.slane %v164, 0
    %vm168 = vcmask 31744
    %v170 = vsel %vm168, %v162, 0
    %v173 = vsel %vm124, %v163, 0
    %175 = vmatpush.msra.mxu0 0.0
    %176 = vmatpush.msra.mxu0 0.0
    %177 = vmatpush.msra.mxu0 0.0
    %178 = vmatpush.msra.mxu0 0.0
    %179 = vmatpush.msra.mxu0 0.0
    %180 = vmatpush.msra.mxu0 0.0
    %181 = vmatpush.msra.mxu0 0.0
    %182 = vmatpush.msra.mxu0 0.0
    %183 = vmatpush.msra.mxu0 0.0
    %184 = vmatpush.msra.mxu0 0.0
    %185 = vmatpush.msra.mxu0 0.0
    %186 = vmatpush.msra.mxu0 0.0
    %187 = vmatpush.msra.mxu0 0.0
    %188 = vmatpush.msra.mxu0 0.0
    %189 = vmatpush.msra.mxu0 0.0
    %190 = vmatpush.msra.mxu0 %v173
    %191 = vmatmul.f32.gmra.mxu0 %v170
    %v192 = vpop.f32.mrf.mxu0
    %v193 = vadd.f32 %v166, %v192
    %194 = vdwg.mxu0
    %v195 = vmax.f32 %v193, 0.0
    %v196 = vld [vmem:[%s11] sm:$0x3f]
    %v197 = vld [vmem:[%s12] sm:$0x1]
    %v199 = vperm.slane %v197, 0
    %v202 = vsel %vm87, %v196, 0
    %204 = vmatpush.msra.mxu0 0.0
    %205 = vmatpush.msra.mxu0 0.0
    %206 = vmatpush.msra.mxu0 0.0
    %207 = vmatpush.msra.mxu0 0.0
    %208 = vmatpush.msra.mxu0 0.0
    %209 = vmatpush.msra.mxu0 0.0
    %210 = vmatpush.msra.mxu0 0.0
    %211 = vmatpush.msra.mxu0 0.0
    %212 = vmatpush.msra.mxu0 0.0
    %213 = vmatpush.msra.mxu0 0.0
    %214 = vmatpush.msra.mxu0 0.0
    %215 = vmatpush.msra.mxu0 0.0
    %216 = vmatpush.msra.mxu0 0.0
    %217 = vmatpush.msra.mxu0 0.0
    %218 = vmatpush.msra.mxu0 0.0
    %219 = vmatpush.msra.mxu0 %v202
    %220 = vmatmul.f32.gmra.mxu0 %v82
    %v221 = vpop.f32.mrf.mxu0
    %v222 = vadd.f32 %v199, %v221
    %223 = vmatmul.f32.gmra.mxu0 %v85
    %v224 = vpop.f32.mrf.mxu0
    %v225 = vadd.f32 %v199, %v224
    %226 = vdwg.mxu0
    %v227 = vpack.c.bf16 %v195, %v195
    %v229 = vsel %vm124, %v227, 0
    %231 = vmatpush.bf16.msra.mxu0 0
    %232 = vmatpush.bf16.msra.mxu0 0
    %233 = vmatpush.bf16.msra.mxu0 0
    %234 = vmatpush.bf16.msra.mxu0 0
    %235 = vmatpush.bf16.msra.mxu0 0
    %236 = vmatpush.bf16.msra.mxu0 0
    %237 = vmatpush.bf16.msra.mxu0 0
    %238 = vmatpush.bf16.msra.mxu0 %v229
    %239 = vmatmul.bf16.gmra.mxu0 %v122
    %v240 = vpop.f32.mrf.mxu0
    %v241 = vadd.f32 %v222, %v240
    %v242 = vpop.f32.mrf.mxu0
    %v243 = vadd.f32 %v225, %v242
    %244 = vdwg.mxu0
    %v245 = vmax.f32 %v241, 0.0
    %v246 = vmax.f32 %v243, 0.0
    %v247 = vpack.c.bf16 %v246, %v245
    %248 = vmatpush.bf16.msra.mxu0 0
    %249 = vmatpush.bf16.msra.mxu0 0
    %250 = vmatpush.bf16.msra.mxu0 0
    %251 = vmatpush.bf16.msra.mxu0 0
    %252 = vmatpush.bf16.msra.mxu0 0
    %253 = vmatpush.bf16.msra.mxu0 0
    %254 = vmatpush.bf16.msra.mxu0 0
    %255 = vmatpush.bf16.msra.mxu0 %v247
    %256 = vmatmul.bf16.gmra.mxu0 %v147
    %v257 = vpop.f32.mrf.mxu0
    %v258 = vadd.f32 0.0, %v257
    %v259 = vpop.f32.mrf.mxu0
    %260 = vdwg.mxu0
    %v261 = vadd.f32 %v195, %v258
    %v262 = vld [vmem:[%s13] sm:$0xff]
    %v263 = vld [vmem:[%s13 + $0x8] sm:$0xff]
    %v264 = vld [vmem:[%s13 + $0x10] sm:$0xff]
    %v265 = vld [vmem:[%s13 + $0x18] sm:$0xff]
    %v266 = vld [vmem:[%s14] sm:$0x1]
    %v268 = vperm.slane %v266, 0
    %vm270 = vcmask 261120
    %v272 = vsel %vm270, %v261, 0
    %274 = vmatpush.msra.mxu0 0.0
    %275 = vmatpush.msra.mxu0 0.0
    %276 = vmatpush.msra.mxu0 0.0
    %277 = vmatpush.msra.mxu0 0.0
    %278 = vmatpush.msra.mxu0 0.0
    %279 = vmatpush.msra.mxu0 0.0
    %280 = vmatpush.msra.mxu0 0.0
    %281 = vmatpush.msra.mxu0 0.0
    %282 = vmatpush.msra.mxu0 0.0
    %283 = vmatpush.msra.mxu0 0.0
    %284 = vmatpush.msra.mxu0 0.0
    %285 = vmatpush.msra.mxu0 0.0
    %286 = vmatpush.msra.mxu0 %v265
    %287 = vmatpush.msra.mxu0 %v264
    %288 = vmatpush.msra.mxu0 %v263
    %289 = vmatpush.msra.mxu0 %v262
    %290 = vmatmul.f32.gmra.mxu0 %v272
    %v291 = vpop.f32.mrf.mxu0
    %v292 = vadd.f32 %v268, %v291
    %293 = vdwg.mxu0
    %v294 = vmax.f32 %v292, 0.0
    %v295 = vpack.c.bf16 %v294, %v294
    %v297 = vsel %vm120, %v72, 0
    %v300 = vsel %vm124, %v295, 0
    %302 = vmatpush.bf16.msra.mxu0 0
    %303 = vmatpush.bf16.msra.mxu0 0
    %304 = vmatpush.bf16.msra.mxu0 0
    %305 = vmatpush.bf16.msra.mxu0 0
    %306 = vmatpush.bf16.msra.mxu0 0
    %307 = vmatpush.bf16.msra.mxu0 0
    %308 = vmatpush.bf16.msra.mxu0 0
    %309 = vmatpush.bf16.msra.mxu0 %v300
    %310 = vmatmul.bf16.gmra.mxu0 %v297
    %v311 = vpop.f32.mrf.mxu0
    %v312 = vadd.f32 0.0, %v311
    %v313 = vpop.f32.mrf.mxu0
    %314 = vdwg.mxu0
    %v315 = vld [vmem:[%s6] sm:$0x3]
    %317 = vset.pattern.permute.xlu0 0
    %318 = vperm.xlu0 %317, %v315
    %v319 = vpop.permute.xlu0 %318
    %v321 = vmul.f32 %v312, %v319
    %323 = vset.pattern.permute.xlu0 0
    %324 = vperm.xlu0 %323, %v73
    %v325 = vpop.permute.xlu0 %324
    %v327 = vadd.f32 %v294, %v325
    %v328 = vsel %vm270, %v327, -inf
    %v329 = vrot.slane %v328, 4
    %v330 = vmax.f32 %v328, %v329
    %v331 = vrot.slane %v330, 2
    %v332 = vmax.f32 %v330, %v331
    %v333 = vrot.slane %v332, 1
    %v334 = vmax.f32 %v332, %v333
    %335 = vset.pattern.permute.xlu0 1
    %336 = vperm.xlu0 %335, %v73
    %v337 = vpop.permute.xlu0 %336
    %v339 = vadd.f32 %v294, %v337
    %v340 = vsel %vm270, %v339, -inf
    %v341 = vrot.slane %v340, 4
    %v342 = vmax.f32 %v340, %v341
    %v343 = vrot.slane %v342, 2
    %v344 = vmax.f32 %v342, %v343
    %v345 = vrot.slane %v344, 1
    %v346 = vmax.f32 %v344, %v345
    %vm347 = vcmask 1040384
    %v348 = vsel %vm347, %v334, %v346
    %v349 = vld [vmem:[%s15] sm:$0xff]
    %v350 = vld [vmem:[%s15 + $0x8] sm:$0xff]
    %v351 = vld [vmem:[%s15 + $0x10] sm:$0xff]
    %v352 = vld [vmem:[%s15 + $0x18] sm:$0xff]
    %v353 = vld [vmem:[%s16] sm:$0xff]
    %v354 = vld [vmem:[%s16 + $0x8] sm:$0xff]
    %v355 = vld [vmem:[%s16 + $0x10] sm:$0xff]
    %v356 = vld [vmem:[%s16 + $0x18] sm:$0xff]
    %v358 = vsel %vm270, %v321, 0
    %360 = vmatpush.msra.mxu0 0.0
    %361 = vmatpush.msra.mxu0 0.0
    %362 = vmatpush.msra.mxu0 0.0
    %363 = vmatpush.msra.mxu0 0.0
    %364 = vmatpush.msra.mxu0 0.0
    %365 = vmatpush.msra.mxu0 0.0
    %366 = vmatpush.msra.mxu0 0.0
    %367 = vmatpush.msra.mxu0 0.0
    %368 = vmatpush.msra.mxu0 0.0
    %369 = vmatpush.msra.mxu0 0.0
    %370 = vmatpush.msra.mxu0 0.0
    %371 = vmatpush.msra.mxu0 0.0
    %372 = vmatpush.msra.mxu0 %v356
    %373 = vmatpush.msra.mxu0 %v355
    %374 = vmatpush.msra.mxu0 %v354
    %375 = vmatpush.msra.mxu0 %v353
    %376 = vmatmul.f32.gmra.mxu0 %v358
    %v377 = vpop.f32.mrf.mxu0
    %v378 = vadd.f32 0.0, %v377
    %379 = vdwg.mxu0
    %v381 = vsel %vm270, %v348, 0
    %383 = vmatpush.msra.mxu0 0.0
    %384 = vmatpush.msra.mxu0 0.0
    %385 = vmatpush.msra.mxu0 0.0
    %386 = vmatpush.msra.mxu0 0.0
    %387 = vmatpush.msra.mxu0 0.0
    %388 = vmatpush.msra.mxu0 0.0
    %389 = vmatpush.msra.mxu0 0.0
    %390 = vmatpush.msra.mxu0 0.0
    %391 = vmatpush.msra.mxu0 0.0
    %392 = vmatpush.msra.mxu0 0.0
    %393 = vmatpush.msra.mxu0 0.0
    %394 = vmatpush.msra.mxu0 0.0
    %395 = vmatpush.msra.mxu0 %v352
    %396 = vmatpush.msra.mxu0 %v351
    %397 = vmatpush.msra.mxu0 %v350
    %398 = vmatpush.msra.mxu0 %v349
    %399 = vmatmul.f32.gmra.mxu0 %v381
    %v400 = vpop.f32.mrf.mxu0
    %v401 = vadd.f32 %v378, %v400
    %402 = vdwg.mxu0
    %v403 = vld [vmem:[%s17] sm:$0x1]
    %v405 = vperm.slane %v403, 0
    %v407 = vadd.f32 %v401, %v405
    %v408 = vmax.f32 %v407, 0.0
    %v409 = vld [vmem:[%s18] sm:$0xff]
    %v410 = vld [vmem:[%s18 + $0x8] sm:$0xff]
    %v411 = vld [vmem:[%s19] sm:$0x1]
    %v413 = vperm.slane %v411, 0
    %v416 = vsel %vm145, %v408, 0
    %418 = vmatpush.msra.mxu0 0.0
    %419 = vmatpush.msra.mxu0 0.0
    %420 = vmatpush.msra.mxu0 0.0
    %421 = vmatpush.msra.mxu0 0.0
    %422 = vmatpush.msra.mxu0 0.0
    %423 = vmatpush.msra.mxu0 0.0
    %424 = vmatpush.msra.mxu0 0.0
    %425 = vmatpush.msra.mxu0 0.0
    %426 = vmatpush.msra.mxu0 0.0
    %427 = vmatpush.msra.mxu0 0.0
    %428 = vmatpush.msra.mxu0 0.0
    %429 = vmatpush.msra.mxu0 0.0
    %430 = vmatpush.msra.mxu0 0.0
    %431 = vmatpush.msra.mxu0 0.0
    %432 = vmatpush.msra.mxu0 %v410
    %433 = vmatpush.msra.mxu0 %v409
    %434 = vmatmul.f32.gmra.mxu0 %v416
    %v435 = vpop.f32.mrf.mxu0
    %v436 = vadd.f32 %v413, %v435
    %437 = vdwg.mxu0
    %vm438 = vcmask 17408
    %439 = vst.msk [vmem:[#allocation2] sm:$0x3] %vm438, %v436
    // Predicated region
    $region82: #{tpu_custom_call.1} parent=1 // pred_check
      _
    $region83: #{tpu_custom_call.1} parent=1 // pred_check_branch
      %441 = sbr.rel (0) target = $region85
    $region84: #{tpu_custom_call.1} parent=1 // pred_region
      %443 = vsyncadd [#allocation3], 0
      %s445 = sshll.u32 [#allocation2], 4
      %s446 = int_to_ptr.vmem [resolvable:$true] %s445
      %s447 = sshll.u32 %s20, 4
      %s448 = int_to_ptr.hbm [resolvable:$true] %s447
      %450 = dma.vmem_to_hbm [thread:$0]  %s446, 32, %s448, [#allocation3]
    $region85: #{tpu_custom_call.1} parent=1 // pred_fallthru
      _
    // Predicated region
    $region86: #{tpu_custom_call.1} parent=1 // pred_check
      _
    $region87: #{tpu_custom_call.1} parent=1 // pred_check_branch
      %452 = sbr.rel (0) target = $region89
    $region88: #{tpu_custom_call.1} parent=1 // pred_region
      %454 = dma.done [#allocation3], 32
    $region89: #{tpu_custom_call.1} parent=1 // pred_fallthru
      _
    %455 = vsyncpa [#allocation3], 1

</llo_original>
